<compile_context>
chip_gen: v5e
topology: v5e:2x2
jax: 0.10.0
libtpu: 0.0.40
codegen_flags: <defaults>
</compile_context>

<pallas_src>
import functools

import jax
import jax.numpy as jnp
from jax.experimental import pallas as pl
from jax.experimental.pallas import tpu as pltpu


def _ce_label_smooth_kernel(logits_ref, targets_ref, partial_ref, *,
                            epsilon, num_classes, true_batch):
    i = pl.program_id(0)

    x = logits_ref[...].astype(jnp.float32)                  # (TB, C)
    tb, c = x.shape

    # Everything is derived from xm = x - rowmax(x); the row max cancels in
    # log_probs = x - lse = xm - log(sum exp(xm)), so the f32 cast of the tile
    # dies right after this subtraction (smaller live set -> bigger tiles).
    m = jnp.max(x, axis=1, keepdims=True)                    # (TB, 1)
    xm = x - m
    log_s = jnp.log(jnp.sum(jnp.exp(xm), axis=1, keepdims=True))   # (TB, 1)

    # sum_c log_probs[b, c] = sum_c xm[b, c] - C * log_s[b]   (no one_hot temps)
    sum_logp = jnp.sum(xm, axis=1, keepdims=True) - c * log_s

    # log_probs[b, target_b] = xm[b, target_b] - log_s[b], via masked reduce.
    # NOTE: targets outside [0, C) silently contribute xm_at_t = 0 (no
    # ignore_index support) -- same restriction as the reference scatter_.
    class_ids = jax.lax.broadcasted_iota(jnp.int32, (tb, c), dimension=1)
    xm_at_t = jnp.sum(jnp.where(class_ids == targets_ref[...], xm, 0.0),
                      axis=1, keepdims=True)                  # (TB, 1)
    logp_at_t = xm_at_t - log_s

    # Label smoothing y = (1-eps)*onehot + eps/K folded into the row loss.
    row_loss = (-(1.0 - epsilon) * logp_at_t
                - (epsilon / num_classes) * sum_logp)         # (TB, 1)

    # Mask rows of the ragged boundary block: reads past row B are unspecified
    # (possibly inf/NaN); the select keeps them out of the reduction entirely.
    row_ids = jax.lax.broadcasted_iota(jnp.int32, (tb, 1), dimension=0) + i * tb
    row_loss = jnp.where(row_ids < true_batch, row_loss, 0.0)

    # Independent per-tile partial (no resident accumulator -> "parallel" axis).
    partial_ref[...] = jnp.full(partial_ref.shape, jnp.sum(row_loss),
                                dtype=jnp.float32)


def cross_entropy_label_smooth(logits, targets, epsilon=0.1, num_classes=None,
                               max_rows_per_tile=4096,
                               tile_budget_bytes=4 * 1024 * 1024):
    """Label-smoothed cross entropy. logits: (B, C) f32/bf16; targets: (B,) int."""
    B, C = logits.shape
    if num_classes is None:
        num_classes = C

    # Layout-aware budgets: Mosaic pads the last dim of every VMEM buffer to a
    # multiple of 128 lanes; (tb, 1) column blocks occupy a full 128 lanes.
    c_pad = 128 * pl.cdiv(C, 128)
    # TODO(synk): for very wide vocabularies (one lane-padded f32 row >> the tile
    # budget) also tile the class axis with an online logsumexp carried in VMEM
    # scratch; not needed for typical re-ID class counts.

    # Row tile: largest multiple of 8 whose lane-padded f32 tile fits the budget.
    tb = tile_budget_bytes // (c_pad * 4)
    tb = max(8, (tb // 8) * 8)
    tb = min(tb, max(8, (int(max_rows_per_tile) // 8) * 8))
    if tb >= B:
        tb = B                      # single full-extent block, no ragged edge
    grid = pl.cdiv(B, tb)

    targets_2d = targets.astype(jnp.int32).reshape(B, 1)

    # Explicit VMEM budget (lane/sublane padded), capped at 48 MiB so it stays
    # inside v7x's 64 MiB physical VMEM with headroom.
    in_itemsize = jnp.dtype(logits.dtype).itemsize
    tb8 = ((tb + 7) // 8) * 8
    vmem_bytes = (2 * tb8 * c_pad * in_itemsize     # double-buffered logits tiles
                  + 4 * tb8 * c_pad * 4             # live (tb, C) f32 temporaries
                  + 2 * tb8 * 128 * 4               # targets blocks (pad to 128 lanes)
                  + 8 * tb8 * 128 * 4               # (tb, 1) f32 row temporaries
                  + 2 * 8 * 128 * 4                 # partial-output blocks
                  + (2 << 20))                      # slack
    vmem_limit = int(min(max(vmem_bytes, 32 * 1024 * 1024), 48 * 1024 * 1024))

    kernel = functools.partial(
        _ce_label_smooth_kernel,
        epsilon=float(epsilon),
        num_classes=int(num_classes),
        true_batch=int(B),
    )

    partials = pl.pallas_call(
        kernel,
        out_shape=jax.ShapeDtypeStruct((grid, 8, 128), jnp.float32),
        grid_spec=pltpu.PrefetchScalarGridSpec(
            num_scalar_prefetch=0,
            grid=(grid,),
            in_specs=[
                pl.BlockSpec((tb, C), lambda i: (i, 0)),
                pl.BlockSpec((tb, 1), lambda i: (i, 0)),
            ],
            out_specs=pl.BlockSpec((1, 8, 128), lambda i: (i, 0, 0)),
        ),
        compiler_params=pltpu.CompilerParams(
            dimension_semantics=("parallel",),
            vmem_limit_bytes=vmem_limit,
        ),
    )(logits, targets_2d)

    # Tiny epilogue: sum per-tile partials, take the batch mean.
    return jnp.sum(partials[:, 0, 0]) / B


def _reference(logits, targets, epsilon=0.1, num_classes=None):
    # Pure-JAX reference mirroring the PyTorch module.
    B, C = logits.shape
    if num_classes is None:
        num_classes = C
    log_probs = jax.nn.log_softmax(logits.astype(jnp.float32), axis=1)
    one_hot = jax.nn.one_hot(targets, C, dtype=jnp.float32)
    smoothed = (1.0 - epsilon) * one_hot + epsilon / num_classes
    return jnp.sum(jnp.mean(-smoothed * log_probs, axis=0))


if __name__ == "__main__":
    key = jax.random.PRNGKey(0)
    k1, k2 = jax.random.split(key)

    batch = 21        # not a multiple of the row tile -> exercises the ragged mask
    num_classes = 37
    epsilon = 0.1

    logits = jax.random.normal(k1, (batch, num_classes), dtype=jnp.float32)
    targets = jax.random.randint(k2, (batch,), 0, num_classes, dtype=jnp.int32)

    ref = _reference(logits, targets, epsilon=epsilon)

    # Multi-tile path: max_rows_per_tile=8 forces a 3-step grid with an unpadded
    # ragged last block (per-tile partial outputs + row masking exercised).
    loss_tiled = cross_entropy_label_smooth(logits, targets, epsilon=epsilon,
                                            max_rows_per_tile=8)
    loss_tiled = jax.block_until_ready(loss_tiled)
    assert jnp.allclose(loss_tiled, ref, rtol=1e-5, atol=1e-5), (loss_tiled, ref)

    # Single-block path (default ~4 MiB tile budget covers the whole batch).
    loss_single = cross_entropy_label_smooth(logits, targets, epsilon=epsilon)
    loss_single = jax.block_until_ready(loss_single)
    assert jnp.allclose(loss_single, ref, rtol=1e-5, atol=1e-5), (loss_single, ref)

    print("KERNEL_OK")
</pallas_src>

<mosaic_0001>
module attributes {stable_mosaic.version = 11 : i64} {
  func.func @_ce_label_smooth_kernel(%arg0: i32, %arg1: memref<8x37xf32, #tpu.memory_space<vmem>>, %arg2: memref<8x1xi32, #tpu.memory_space<vmem>>, %arg3: memref<1x8x128xf32, #tpu.memory_space<vmem>>) attributes {dimension_semantics = [#tpu.dimension_semantics<parallel>], iteration_bounds = array<i64: 3>, scalar_prefetch = 0 : i64, scratch_operands = 0 : i64, tpu.core_type = #tpu.core_type<tc>, window_params = [{transform_indices = @transform_0, window_bounds = array<i64: 8, 37>}, {transform_indices = @transform_1, window_bounds = array<i64: 8, 1>}, {transform_indices = @transform_2, window_bounds = array<i64: 1, 8, 128>}]} {
    %c0 = arith.constant 0 : index
    %c0_0 = arith.constant 0 : index
    %0 = vector.load %arg1[%c0, %c0_0] : memref<8x37xf32, #tpu.memory_space<vmem>>, vector<8x37xf32>
    %cst = arith.constant dense<0xFF800000> : vector<8xf32>
    %1 = vector.multi_reduction <maximumf>, %0, %cst [1] : vector<8x37xf32> to vector<8xf32>
    %2 = vector.shape_cast %1 : vector<8xf32> to vector<8x1xf32>
    %3 = vector.broadcast %2 : vector<8x1xf32> to vector<8x37xf32>
    %4 = arith.subf %0, %3 : vector<8x37xf32>
    %5 = math.exp %4 : vector<8x37xf32>
    %cst_1 = arith.constant dense<0.000000e+00> : vector<8xf32>
    %6 = vector.multi_reduction <add>, %5, %cst_1 [1] : vector<8x37xf32> to vector<8xf32>
    %7 = vector.shape_cast %6 : vector<8xf32> to vector<8x1xf32>
    %8 = math.log %7 : vector<8x1xf32>
    %cst_2 = arith.constant dense<0.000000e+00> : vector<8xf32>
    %9 = vector.multi_reduction <add>, %4, %cst_2 [1] : vector<8x37xf32> to vector<8xf32>
    %10 = vector.shape_cast %9 : vector<8xf32> to vector<8x1xf32>
    %cst_3 = arith.constant 3.700000e+01 : f32
    %11 = vector.broadcast %cst_3 : f32 to vector<8x1xf32>
    %12 = arith.mulf %11, %8 : vector<8x1xf32>
    %13 = arith.subf %10, %12 : vector<8x1xf32>
    %14 = tpu.iota {dimensions = array<i32: 1>} : vector<8x37xi32>
    %c0_4 = arith.constant 0 : index
    %c0_5 = arith.constant 0 : index
    %15 = vector.load %arg2[%c0_4, %c0_5] : memref<8x1xi32, #tpu.memory_space<vmem>>, vector<8x1xi32>
    %16 = vector.broadcast %15 : vector<8x1xi32> to vector<8x37xi32>
    %17 = arith.cmpi eq, %14, %16 : vector<8x37xi32>
    %cst_6 = arith.constant 0.000000e+00 : f32
    %18 = vector.broadcast %cst_6 : f32 to vector<8x37xf32>
    %19 = arith.select %17, %4, %18 : vector<8x37xi1>, vector<8x37xf32>
    %cst_7 = arith.constant dense<0.000000e+00> : vector<8xf32>
    %20 = vector.multi_reduction <add>, %19, %cst_7 [1] : vector<8x37xf32> to vector<8xf32>
    %21 = vector.shape_cast %20 : vector<8xf32> to vector<8x1xf32>
    %22 = arith.subf %21, %8 : vector<8x1xf32>
    %cst_8 = arith.constant -0.899999976 : f32
    %23 = vector.broadcast %cst_8 : f32 to vector<8x1xf32>
    %24 = arith.mulf %23, %22 : vector<8x1xf32>
    %cst_9 = arith.constant 0.00270270277 : f32
    %25 = vector.broadcast %cst_9 : f32 to vector<8x1xf32>
    %26 = arith.mulf %25, %13 : vector<8x1xf32>
    %27 = arith.subf %24, %26 : vector<8x1xf32>
    %28 = tpu.iota {dimensions = array<i32: 0>} : vector<8x1xi32>
    %c8_i32 = arith.constant 8 : i32
    %29 = arith.muli %arg0, %c8_i32 : i32
    %30 = vector.broadcast %29 : i32 to vector<8x1xi32>
    %31 = arith.addi %28, %30 : vector<8x1xi32>
    %c21_i32 = arith.constant 21 : i32
    %32 = vector.broadcast %c21_i32 : i32 to vector<8x1xi32>
    %33 = arith.cmpi slt, %31, %32 : vector<8x1xi32>
    %cst_10 = arith.constant 0.000000e+00 : f32
    %34 = vector.broadcast %cst_10 : f32 to vector<8x1xf32>
    %35 = arith.select %33, %27, %34 : vector<8x1xi1>, vector<8x1xf32>
    %36 = vector.shape_cast %35 : vector<8x1xf32> to vector<1x8x1xf32>
    %cst_11 = arith.constant dense<0.000000e+00> : vector<1xf32>
    %37 = vector.multi_reduction <add>, %36, %cst_11 [1, 2] : vector<1x8x1xf32> to vector<1xf32>
    %38 = vector.shape_cast %37 : vector<1xf32> to vector<1x1x1xf32>
    %39 = vector.extract %38[0, 0, 0] : f32 from vector<1x1x1xf32>
    %40 = vector.broadcast %39 : f32 to vector<1x8x128xf32>
    %c0_12 = arith.constant 0 : index
    %c0_13 = arith.constant 0 : index
    %c0_14 = arith.constant 0 : index
    %41 = vector.load %arg3[%c0_12, %c0_13, %c0_14] : memref<1x8x128xf32, #tpu.memory_space<vmem>>, vector<1x8x128xf32>
    tpu.vector_store %arg3[%c0_12, %c0_13, %c0_14], %40 {strides = array<i32>} : memref<1x8x128xf32, #tpu.memory_space<vmem>>, vector<1x8x128xf32>,
    return
  }
  func.func @transform_0(%arg0: i32) -> (i32, i32) {
    %c0_i32 = arith.constant 0 : i32
    %c0_i32_0 = arith.constant 0 : i32
    return %arg0, %c0_i32 : i32, i32
  }
  func.func @transform_1(%arg0: i32) -> (i32, i32) {
    %c0_i32 = arith.constant 0 : i32
    %c0_i32_0 = arith.constant 0 : i32
    return %arg0, %c0_i32 : i32, i32
  }
  func.func @transform_2(%arg0: i32) -> (i32, i32, i32) {
    %c0_i32 = arith.constant 0 : i32
    %c0_i32_0 = arith.constant 0 : i32
    %c0_i32_1 = arith.constant 0 : i32
    return %arg0, %c0_i32, %c0_i32_0 : i32, i32, i32
  }
}

</mosaic_0001>

<llo_original>
// kernel: tpu_custom_call.1
$region0: #{tpu_custom_call.1}
  #allocation0 [shape = 'u32[]', space=smem, size = 0x4, offset = 0x4, fixed_abs, tag = 'smem constant byte address 0x4 - core index']
  #allocation1 [shape = 'u32[72,128]{1,0:T(1,128)}', space=vmem, size = 0x9000, scoped, tag = 'internal scratch']
  %s0 = inlined_call_operand.vmem [shape: f32[21,37], index: 0, kind: input, shape index: {}]
  %s1 = inlined_call_operand.vmem [shape: s32[21,1], index: 1, kind: input, shape index: {}]
  %s2 = inlined_call_operand.hbm [shape: f32[3,8,128], index: 2, kind: output, shape index: {}]
  %s3 = sld [smem:[#allocation0]]
  $region41: #{tpu_custom_call.1} parent=0
    _
  %s5 = ssub.s32 1, %s3
  %s6 = scalar_select 0, %s5, %s3
  $region1: #{tpu_custom_call.1} parent=0
    #allocation2 [shape = 'u8[8192]{0}', space=vmem, size = 0x2000, scoped, tag = 'output window, operand 0']
    #allocation3 [shape = 's32[2]{0}', space=sflag, size = 0x8, scoped, tag = 'scoped memory for tpu_custom_call.1']
    %7 = vsyncpa [#allocation3], 0
    %s8 = scalar_lea.sflag [#allocation3], 1
    %9 = vsyncpa %s8, 0
    loop: start=0, step=1, limit=5
    $region2: #{tpu_custom_call.1} parent=1 // loop_pre_header
      _
    $region3: #{tpu_custom_call.1} parent=1 // loop_header
      %s11 = sphi 0, %s15
      %p12 = scmp.ge.s32.totalorder %s11, 5
      %s21 = sphi 0, %s23
      %s24 = sphi 0, %s21
      %s25 = sphi 0, %s24
      %s41 = sphi 0, %s25
      %s47 = sphi 0, %s49
      %s50 = sphi 0, %s47
      %s51 = sphi 0, %s50
      %s67 = sphi 0, %s51
      %s73 = sphi 0, %s75
      %s76 = sphi 0, %s73
      %s77 = sphi 0, %s76
      %s93 = sphi 0, %s77
    $region4: #{tpu_custom_call.1} parent=1 // loop_header_branch
      %14 = sbr.rel (%p12) target = $region8
    $region5: #{tpu_custom_call.1} parent=1 // loop_body
      %s16 = ssub.s32 %s11, 1
      %s17 = ssub.s32 %s11, 2
      %s18 = sadd.s32 %s11, 1
      %s19 = ssub.s32 %s11, %s18
      %p20 = scmp.eq.s32.totalorder %s19, 0
      %s22 = sadd.s32 %s21, 1
      %s23 = scalar_select %p20, %s21, %s22
      %p26 = pneg %p20
      %p27 = scmp.eq.s32.totalorder %s11, 2
      %p28 = por %p26, %p27
      %p29 = scmp.ne.s32.totalorder %s21, %s24
      %p30 = scmp.eq.s32.totalorder %s11, 0
      %p31 = por %p29, %p30
      %p32 = scmp.ne.s32.totalorder %s21, %s24
      %p33 = scmp.eq.s32.totalorder %s16, 2
      %p34 = por %p32, %p33
      %p35 = scmp.ne.s32.totalorder %s24, %s25
      %p36 = scmp.eq.s32.totalorder %s16, 0
      %p37 = por %p35, %p36
      %p38 = scmp.ne.s32.totalorder %s24, %s25
      %p39 = scmp.eq.s32.totalorder %s17, 2
      %p40 = por %p38, %p39
      %p42 = scmp.ne.s32.totalorder %s25, %s41
      %p43 = scmp.eq.s32.totalorder %s17, 0
      %p44 = por %p42, %p43
      %s45 = ssub.s32 %s11, %s18
      %p46 = scmp.eq.s32.totalorder %s45, 0
      %s48 = sadd.s32 %s47, 1
      %s49 = scalar_select %p46, %s47, %s48
      %p52 = pneg %p46
      %p53 = scmp.eq.s32.totalorder %s11, 2
      %p54 = por %p52, %p53
      %p55 = scmp.ne.s32.totalorder %s47, %s50
      %p56 = scmp.eq.s32.totalorder %s11, 0
      %p57 = por %p55, %p56
      %p58 = scmp.ne.s32.totalorder %s47, %s50
      %p59 = scmp.eq.s32.totalorder %s16, 2
      %p60 = por %p58, %p59
      %p61 = scmp.ne.s32.totalorder %s50, %s51
      %p62 = scmp.eq.s32.totalorder %s16, 0
      %p63 = por %p61, %p62
      %p64 = scmp.ne.s32.totalorder %s50, %s51
      %p65 = scmp.eq.s32.totalorder %s17, 2
      %p66 = por %p64, %p65
      %p68 = scmp.ne.s32.totalorder %s51, %s67
      %p69 = scmp.eq.s32.totalorder %s17, 0
      %p70 = por %p68, %p69
      %s71 = ssub.s32 %s11, %s18
      %p72 = scmp.eq.s32.totalorder %s71, 0
      %s74 = sadd.s32 %s73, 1
      %s75 = scalar_select %p72, %s73, %s74
      %p78 = pneg %p72
      %p79 = scmp.eq.s32.totalorder %s11, 2
      %p80 = por %p78, %p79
      %p81 = scmp.ne.s32.totalorder %s73, %s76
      %p82 = scmp.eq.s32.totalorder %s11, 0
      %p83 = por %p81, %p82
      %p84 = scmp.ne.s32.totalorder %s73, %s76
      %p85 = scmp.eq.s32.totalorder %s16, 2
      %p86 = por %p84, %p85
      %p87 = scmp.ne.s32.totalorder %s76, %s77
      %p88 = scmp.eq.s32.totalorder %s16, 0
      %p89 = por %p87, %p88
      %p90 = scmp.ne.s32.totalorder %s76, %s77
      %p91 = scmp.eq.s32.totalorder %s17, 2
      %p92 = por %p90, %p91
      %p94 = scmp.ne.s32.totalorder %s77, %s93
      %p95 = scmp.eq.s32.totalorder %s17, 0
      %p96 = por %p94, %p95
      %p97 = scmp.le.s32.totalorder 1, %s11
      %p98 = scmp.lt.s32.totalorder %s11, 4
      %p99 = pnand %p97, %p98
      %p100 = pneg %p99
      // Predicated region
      $region9: #{tpu_custom_call.1} parent=5 // pred_check
        _
      $region10: #{tpu_custom_call.1} parent=5 // pred_check_branch
        %102 = sbr.rel (%p99) target = $region12
      $region11: #{tpu_custom_call.1} parent=5 // pred_region
        %s103 = ssub.s32 %s11, 1
      $region12: #{tpu_custom_call.1} parent=5 // pred_fallthru
        _
      %p104 = scmp.lt.s32.totalorder %s11, 3
      // Predicated region
      $region13: #{tpu_custom_call.1} parent=5 // pred_check
        %p105 = pneg %p104
      $region14: #{tpu_custom_call.1} parent=5 // pred_check_branch
        %107 = sbr.rel (%p105) target = $region16
      $region15: #{tpu_custom_call.1} parent=5 // pred_region
        // Predicated region
        $region17: #{tpu_custom_call.1} parent=15 // pred_check
          %p108 = pneg %p31
        $region18: #{tpu_custom_call.1} parent=15 // pred_check_branch
          %110 = sbr.rel (%p108) target = $region20
        $region19: #{tpu_custom_call.1} parent=15 // pred_region
          %p111 = scmp.lt.s32.totalorder %s11, 2
          %s112 = scalar_select %p111, %s11, 2
          %s113 = smul.addr %s112, 8
          %s114 = scalar_lea.vmem %s0, %s113
        $region20: #{tpu_custom_call.1} parent=15 // pred_fallthru
          _
        // Predicated region
        $region21: #{tpu_custom_call.1} parent=15 // pred_check
          %p115 = pneg %p57
        $region22: #{tpu_custom_call.1} parent=15 // pred_check_branch
          %117 = sbr.rel (%p115) target = $region24
        $region23: #{tpu_custom_call.1} parent=15 // pred_region
          %p118 = scmp.lt.s32.totalorder %s11, 2
          %s119 = scalar_select %p118, %s11, 2
          %s120 = smul.addr %s119, 8
          %s121 = scalar_lea.vmem %s1, %s120
        $region24: #{tpu_custom_call.1} parent=15 // pred_fallthru
          _
      $region16: #{tpu_custom_call.1} parent=5 // pred_fallthru
        _
      %p122 = scmp.le.s32.totalorder 1, %s11
      %p123 = scmp.lt.s32.totalorder %s11, 4
      %p124 = pnand %p122, %p123
      %p125 = pneg %p124
      // Predicated region
      $region25: #{tpu_custom_call.1} parent=5 // pred_check
        _
      $region26: #{tpu_custom_call.1} parent=5 // pred_check_branch
        %127 = sbr.rel (%p124) target = $region28
      $region27: #{tpu_custom_call.1} parent=5 // pred_region
        %s128 = ssub.s32 %s11, 1
        %p129 = scmp.lt.s32.totalorder %s16, 2
        %s130 = scalar_select %p129, %s16, 2
        %s131 = smul.addr %s130, 8
        %s132 = scalar_lea.vmem %s0, %s131
        %p133 = pneg %p37
        %p134 = pneg %p34
        %p135 = scmp.lt.s32.totalorder %s16, 2
        %s136 = scalar_select %p135, %s16, 2
        %s137 = smul.addr %s136, 8
        %s138 = scalar_lea.vmem %s1, %s137
        %p139 = pneg %p63
        %p140 = pneg %p60
        %p141 = pneg %p89
        %p142 = pneg %p86
        %s143 = sand.u32 %s76, 1
        %s144 = scalar_lea.sflag [#allocation3], %s143
        %s145 = sand.u32 %s76, 1
        %s146 = smul.addr %s145, 8
        %s147 = scalar_lea.vmem [#allocation2], %s146
        %p148 = scmp.lt.s32.totalorder %s16, 2
        %s149 = scalar_select %p148, %s16, 2
        %s150 = smul.addr %s149, 8
        %s151 = scalar_lea.vmem %s0, %s150
        %p152 = scmp.lt.s32.totalorder %s16, 2
        %s153 = scalar_select %p152, %s16, 2
        %s154 = smul.addr %s153, 8
        %s155 = scalar_lea.vmem %s1, %s154
        %v156 = vld [vmem:[%s151] sm:$0xff]
        %vm157 = vcmask 302080
        %v158 = vsel %vm157, %v156, -inf
        %159 = vmax.xlane.f32.xlu0 %v158
        %v160 = vpop.xlane.xlu0 %159
        %v161 = vsub.f32 %v156, %v160
        %v162 = vmul.f32 %v161, 1.442695
        %v163 = vpow.pop %v162
        %v164 = vsel %vm157, %v163, 0.0
        %165 = vadd.xlane.f32.xlu0 %v164
        %v166 = vpop.xlane.xlu0 %165
        %v167 = vlog2.pop %v166
        %v168 = vmul.f32 %v167, 0.6931472
        %v169 = vsel %vm157, %v161, 0.0
        %170 = vadd.xlane.f32.xlu0 %v169
        %v171 = vpop.xlane.xlu0 %170
        %v172 = vmul.f32 %v168, 37.0
        %v173 = vsub.f32 %v171, %v172
        %v174 = vlaneseq
        %v175 = vand.u32 %v174, 127
        %v176 = vld [vmem:[%s155] sm:$0xff]
        %177 = vset.pattern.permute.xlu0 0
        %178 = vperm.xlu0 %177, %v176
        %v179 = vpop.permute.xlu0 %178
        %vm180 = vcmp.eq.s32.totalorder %v175, %v179
        %v181 = vsel %vm180, %v161, 0.0
        %v182 = vsel %vm157, %v181, 0.0
        %183 = vadd.xlane.f32.xlu0 %v182
        %v184 = vpop.xlane.xlu0 %183
        %v185 = vsub.f32 %v184, %v168
        %v186 = vmul.f32 %v185, -0.9
        %v187 = vmul.f32 %v173, 0.0027027028
        %v188 = vsub.f32 %v186, %v187
        %v189 = vlaneseq
        %v190 = vshrl.u32 %v189, 7
        %s191 = smul.u32 %s16, 8
        %v192 = vstv %s191
        %v193 = vadd.s32 %v190, %v192
        %vm194 = vcmp.lt.s32.totalorder %v193, 21
        %v195 = vsel %vm194, %v188, 0.0
        %vm196 = vcmask 7168
        %v197 = vsel %vm196, %v195, 0.0
        %198 = vadd.xlane.f32.xlu0 %v197
        %v199 = vpop.xlane.xlu0 %198
        %v200 = vrot.slane %v199, 4
        %v201 = vadd.f32 %v199, %v200
        %v202 = vrot.slane %v201, 2
        %v203 = vadd.f32 %v201, %v202
        %v204 = vrot.slane %v203, 1
        %v205 = vadd.f32 %v203, %v204
        %s206 = vtos %v205
        %v207 = vstv %s206
        %208 = vst [vmem:[%s147] sm:$0xff] %v207
        %s209 = sand.u32 %s76, 1
        %s210 = scalar_lea.sflag [#allocation3], %s209
        %s211 = sand.u32 %s76, 1
        %s212 = smul.addr %s211, 8
        %s213 = scalar_lea.vmem [#allocation2], %s212
        // Predicated region
        $region29: #{tpu_custom_call.1} parent=27 // pred_check
          %p214 = pneg %p86
        $region30: #{tpu_custom_call.1} parent=27 // pred_check_branch
          %216 = sbr.rel (%p214) target = $region32
        $region31: #{tpu_custom_call.1} parent=27 // pred_region
          %218 = vsyncadd %s210, 0
          %s219 = smul.addr %s16, 8
          %s220 = scalar_lea.hbm %s2, %s219
          %s222 = sshll.u32 %s213, 4
          %s223 = int_to_ptr.vmem [resolvable:$true] %s222
          %s224 = sshll.u32 %s220, 4
          %s225 = int_to_ptr.hbm [resolvable:$true] %s224
          %227 = dma.vmem_to_hbm [thread:$0]  %s223, 128, %s225, %s210
        $region32: #{tpu_custom_call.1} parent=27 // pred_fallthru
          _
      $region28: #{tpu_custom_call.1} parent=5 // pred_fallthru
        _
      %p228 = scmp.le.s32.totalorder 2, %s11
      // Predicated region
      $region33: #{tpu_custom_call.1} parent=5 // pred_check
        %p229 = pneg %p228
      $region34: #{tpu_custom_call.1} parent=5 // pred_check_branch
        %231 = sbr.rel (%p229) target = $region36
      $region35: #{tpu_custom_call.1} parent=5 // pred_region
        %s232 = ssub.s32 %s11, 2
        // Predicated region
        $region37: #{tpu_custom_call.1} parent=35 // pred_check
          %p233 = pneg %p92
        $region38: #{tpu_custom_call.1} parent=35 // pred_check_branch
          %235 = sbr.rel (%p233) target = $region40
        $region39: #{tpu_custom_call.1} parent=35 // pred_region
          %s236 = sand.u32 %s77, 1
          %s237 = scalar_lea.sflag [#allocation3], %s236
          %s238 = sand.u32 %s77, 1
          %s239 = smul.addr %s238, 8
          %s240 = scalar_lea.vmem [#allocation2], %s239
          %242 = dma.done %s237, 128
        $region40: #{tpu_custom_call.1} parent=35 // pred_fallthru
          _
      $region36: #{tpu_custom_call.1} parent=5 // pred_fallthru
        _
    $region6: #{tpu_custom_call.1} parent=1 // loop_footer
      %s15 = sadd.s32 1, %s11
    $region7: #{tpu_custom_call.1} parent=1 // loop_footer_branch
      %10 = sbr.rel target = $region3
    $region8: #{tpu_custom_call.1} parent=1 // loop_exit
      _
    %243 = vsyncpa [#allocation3], 1
    %s244 = scalar_lea.sflag [#allocation3], 1
    %245 = vsyncpa %s244, 1

</llo_original>
